<compile_context>
chip_gen: v6e
topology: v6e:2x2x1
jax: 0.10.0
libtpu: 0.0.40
codegen_flags: <defaults>
</compile_context>

<pallas_src>
import jax
import jax.numpy as jnp
from jax.experimental import pallas as pl
from jax.experimental.pallas import tpu as pltpu

LANE = 128      # vreg lane width
SUBLANE = 8     # vreg sublane height


def _round_up(x, m):
    return (x + m - 1) // m * m


def wnet_kernel(x_ref, w1_ref, b1_ref, w2_ref, b2_ref, out_ref, h_ref):
    # Layer 1: (TB, In) @ (In, Hp) -> f32 accumulate on the MXU.
    h = jnp.dot(x_ref[...], w1_ref[...], preferred_element_type=jnp.float32)
    h = jnp.maximum(h + b1_ref[...], 0.0)            # bias + ReLU in f32
    # Stage the hidden activation in a lane-aligned VMEM scratch so the
    # second matmul reads a clean MXU-shaped (TB, 128) tile.
    h_ref[...] = h
    # Layer 2: (TB, Hp) @ (Hp, Op) -> f32 accumulate, then sigmoid.
    o = jnp.dot(h_ref[...].astype(w2_ref.dtype), w2_ref[...],
                preferred_element_type=jnp.float32)
    out_ref[...] = jax.nn.sigmoid(o + b2_ref[...])


def wnet_forward(x, w1, b1, w2, b2, *, block_b=256, use_bf16=False):
    """x: (B, In); w1: (In, H); b1: (1, H); w2: (H, Out); b2: (1, Out)."""
    B, n_in = x.shape
    n_hidden = w1.shape[1]
    n_out = w2.shape[1]

    hp = _round_up(n_hidden, LANE)          # lane-dense hidden width
    op = _round_up(n_out, LANE)             # lane-dense output width
    tb = min(block_b, _round_up(B, SUBLANE))
    bp = _round_up(B, tb)                   # padded batch
    nb = bp // tb

    # Zero padding: padded hidden columns (w1/b1) stay exactly 0 after ReLU,
    # and padded w2 rows/cols are 0, so padding cannot leak into real outputs.
    # Padded output lanes / batch rows are sliced away below.
    xp = jnp.pad(x, ((0, bp - B), (0, 0)))
    w1p = jnp.pad(w1, ((0, 0), (0, hp - n_hidden)))
    b1p = jnp.pad(b1.reshape(1, -1), ((0, 0), (0, hp - n_hidden)))
    w2p = jnp.pad(w2, ((0, hp - n_hidden), (0, op - n_out)))
    b2p = jnp.pad(b2.reshape(1, -1), ((0, 0), (0, op - n_out)))

    # Optional bf16 matmul operands (v6e/v7x MXU); accumulation stays f32 and
    # biases / elementwise work stay f32 (no bf16 VPU/EUP on v5e).
    operand_dtype = jnp.bfloat16 if use_bf16 else jnp.float32
    xp = xp.astype(operand_dtype)
    w1p = w1p.astype(operand_dtype)
    w2p = w2p.astype(operand_dtype)
    b1p = b1p.astype(jnp.float32)
    b2p = b2p.astype(jnp.float32)

    cost = pl.CostEstimate(
        flops=2 * bp * (n_in * hp + hp * op),
        transcendentals=bp * op,            # exp inside sigmoid
        bytes_accessed=(xp.size * xp.dtype.itemsize
                        + w1p.size * w1p.dtype.itemsize
                        + w2p.size * w2p.dtype.itemsize
                        + b1p.size * 4 + b2p.size * 4
                        + bp * op * 4),
    )

    out_padded = pl.pallas_call(
        wnet_kernel,
        out_shape=jax.ShapeDtypeStruct((bp, op), jnp.float32),
        grid=(nb,),
        in_specs=[
            pl.BlockSpec((tb, n_in), lambda i: (i, 0)),   # x: tiled over batch
            pl.BlockSpec((n_in, hp), lambda i: (0, 0)),   # w1: resident
            pl.BlockSpec((1, hp), lambda i: (0, 0)),      # b1: resident
            pl.BlockSpec((hp, op), lambda i: (0, 0)),     # w2: resident
            pl.BlockSpec((1, op), lambda i: (0, 0)),      # b2: resident
        ],
        out_specs=pl.BlockSpec((tb, op), lambda i: (i, 0)),
        scratch_shapes=[pltpu.VMEM((tb, hp), jnp.float32)],
        compiler_params=pltpu.CompilerParams(
            dimension_semantics=("parallel",)),
        cost_estimate=cost,
    )(xp, w1p, b1p, w2p, b2p)

    return out_padded[:B, :n_out]


def init_params(key, n_in, n_hidden, n_out):
    """Deterministic PyTorch-style (uniform +/- 1/sqrt(fan_in)) init."""
    k1, k2, k3, k4 = jax.random.split(key, 4)
    bound1 = 1.0 / jnp.sqrt(n_in)
    bound2 = 1.0 / jnp.sqrt(n_hidden)
    # Weights stored as (in, out), i.e. transpose of PyTorch's (out, in).
    w1 = jax.random.uniform(k1, (n_in, n_hidden), jnp.float32, -bound1, bound1)
    b1 = jax.random.uniform(k2, (1, n_hidden), jnp.float32, -bound1, bound1)
    w2 = jax.random.uniform(k3, (n_hidden, n_out), jnp.float32, -bound2, bound2)
    b2 = jax.random.uniform(k4, (1, n_out), jnp.float32, -bound2, bound2)
    return w1, b1, w2, b2


if __name__ == "__main__":
    # Small shapes implied by the module: batch=8, input=32, hidden=64, output=16
    B, N_IN, N_HID, N_OUT = 8, 32, 64, 16

    key = jax.random.PRNGKey(0)
    kx, kp = jax.random.split(key)
    x = jax.random.normal(kx, (B, N_IN), dtype=jnp.float32)
    w1, b1, w2, b2 = init_params(kp, N_IN, N_HID, N_OUT)

    # f32 path (exact semantics of the PyTorch module).
    out = jax.block_until_ready(wnet_forward(x, w1, b1, w2, b2))
    ref = jax.nn.sigmoid(jnp.maximum(x @ w1 + b1, 0.0) @ w2 + b2)
    assert out.shape == (B, N_OUT)
    assert jnp.allclose(out, ref, atol=1e-5, rtol=1e-5)

    # bf16-operand path (v6e/v7x MXU): f32 accumulation, looser tolerance.
    out_bf16 = jax.block_until_ready(
        wnet_forward(x, w1, b1, w2, b2, use_bf16=True))
    assert out_bf16.shape == (B, N_OUT)
    assert jnp.allclose(out_bf16, ref, atol=2e-2, rtol=2e-2)

    print("KERNEL_OK")
</pallas_src>

<mosaic_0001>
module attributes {stable_mosaic.version = 11 : i64} {
  func.func @wnet_kernel(%arg0: i32, %arg1: memref<8x32xf32, #tpu.memory_space<vmem>>, %arg2: memref<32x128xf32, #tpu.memory_space<vmem>>, %arg3: memref<1x128xf32, #tpu.memory_space<vmem>>, %arg4: memref<128x128xf32, #tpu.memory_space<vmem>>, %arg5: memref<1x128xf32, #tpu.memory_space<vmem>>, %arg6: memref<8x128xf32, #tpu.memory_space<vmem>>, %arg7: memref<8x128xf32, #tpu.memory_space<vmem>>) attributes {dimension_semantics = [#tpu.dimension_semantics<parallel>], iteration_bounds = array<i64: 1>, scalar_prefetch = 0 : i64, scratch_operands = 1 : i64, tpu.core_type = #tpu.core_type<tc>, window_params = [{transform_indices = @transform_0, window_bounds = array<i64: 8, 32>}, {pipeline_mode = #tpu.pipeline_mode<synchronous>, transform_indices = @transform_1, window_bounds = array<i64: 32, 128>}, {pipeline_mode = #tpu.pipeline_mode<synchronous>, transform_indices = @transform_2, window_bounds = array<i64: 1, 128>}, {pipeline_mode = #tpu.pipeline_mode<synchronous>, transform_indices = @transform_3, window_bounds = array<i64: 128, 128>}, {pipeline_mode = #tpu.pipeline_mode<synchronous>, transform_indices = @transform_4, window_bounds = array<i64: 1, 128>}, {transform_indices = @transform_5, window_bounds = array<i64: 8, 128>}]} {
    %c0 = arith.constant 0 : index
    %c0_0 = arith.constant 0 : index
    %0 = vector.load %arg1[%c0, %c0_0] : memref<8x32xf32, #tpu.memory_space<vmem>>, vector<8x32xf32>
    %c0_1 = arith.constant 0 : index
    %c0_2 = arith.constant 0 : index
    %1 = vector.load %arg2[%c0_1, %c0_2] : memref<32x128xf32, #tpu.memory_space<vmem>>, vector<32x128xf32>
    %cst = arith.constant dense<0.000000e+00> : vector<8x128xf32>
    %2 = tpu.matmul %0, %1, %cst {dimension_numbers = #tpu.dot_dimension_numbers<[1], [0], [0], [1], [0, 0, 1, 1], [], []>} : vector<8x32xf32>, vector<32x128xf32>, vector<8x128xf32> -> vector<8x128xf32>
    %c0_3 = arith.constant 0 : index
    %c0_4 = arith.constant 0 : index
    %3 = vector.load %arg3[%c0_3, %c0_4] : memref<1x128xf32, #tpu.memory_space<vmem>>, vector<1x128xf32>
    %4 = vector.broadcast %3 : vector<1x128xf32> to vector<8x128xf32>
    %5 = arith.addf %2, %4 : vector<8x128xf32>
    %cst_5 = arith.constant 0.000000e+00 : f32
    %6 = vector.broadcast %cst_5 : f32 to vector<8x128xf32>
    %7 = arith.maximumf %5, %6 : vector<8x128xf32>
    %c0_6 = arith.constant 0 : index
    %c0_7 = arith.constant 0 : index
    %8 = vector.load %arg7[%c0_6, %c0_7] : memref<8x128xf32, #tpu.memory_space<vmem>>, vector<8x128xf32>
    tpu.vector_store %arg7[%c0_6, %c0_7], %7 {strides = array<i32>} : memref<8x128xf32, #tpu.memory_space<vmem>>, vector<8x128xf32>,
    %c0_8 = arith.constant 0 : index
    %c0_9 = arith.constant 0 : index
    %9 = vector.load %arg7[%c0_8, %c0_9] : memref<8x128xf32, #tpu.memory_space<vmem>>, vector<8x128xf32>
    %c0_10 = arith.constant 0 : index
    %c0_11 = arith.constant 0 : index
    %10 = vector.load %arg4[%c0_10, %c0_11] : memref<128x128xf32, #tpu.memory_space<vmem>>, vector<128x128xf32>
    %cst_12 = arith.constant dense<0.000000e+00> : vector<8x128xf32>
    %11 = tpu.matmul %9, %10, %cst_12 {dimension_numbers = #tpu.dot_dimension_numbers<[1], [0], [0], [1], [0, 0, 1, 1], [], []>} : vector<8x128xf32>, vector<128x128xf32>, vector<8x128xf32> -> vector<8x128xf32>
    %c0_13 = arith.constant 0 : index
    %c0_14 = arith.constant 0 : index
    %12 = vector.load %arg5[%c0_13, %c0_14] : memref<1x128xf32, #tpu.memory_space<vmem>>, vector<1x128xf32>
    %13 = vector.broadcast %12 : vector<1x128xf32> to vector<8x128xf32>
    %14 = arith.addf %11, %13 : vector<8x128xf32>
    %15 = arith.negf %14 : vector<8x128xf32>
    %16 = math.exp %15 : vector<8x128xf32>
    %cst_15 = arith.constant 1.000000e+00 : f32
    %17 = vector.broadcast %cst_15 : f32 to vector<8x128xf32>
    %18 = arith.addf %17, %16 : vector<8x128xf32>
    %19 = arith.divf %17, %18 : vector<8x128xf32>
    %c0_16 = arith.constant 0 : index
    %c0_17 = arith.constant 0 : index
    %20 = vector.load %arg6[%c0_16, %c0_17] : memref<8x128xf32, #tpu.memory_space<vmem>>, vector<8x128xf32>
    tpu.vector_store %arg6[%c0_16, %c0_17], %19 {strides = array<i32>} : memref<8x128xf32, #tpu.memory_space<vmem>>, vector<8x128xf32>,
    return
  }
  func.func @transform_0(%arg0: i32) -> (i32, i32) {
    %c0_i32 = arith.constant 0 : i32
    %c0_i32_0 = arith.constant 0 : i32
    return %arg0, %c0_i32 : i32, i32
  }
  func.func @transform_1(%arg0: i32) -> (i32, i32) {
    %c0_i32 = arith.constant 0 : i32
    %c0_i32_0 = arith.constant 0 : i32
    %c0_i32_1 = arith.constant 0 : i32
    return %c0_i32, %c0_i32_0 : i32, i32
  }
  func.func @transform_2(%arg0: i32) -> (i32, i32) {
    %c0_i32 = arith.constant 0 : i32
    %c0_i32_0 = arith.constant 0 : i32
    %c0_i32_1 = arith.constant 0 : i32
    return %c0_i32, %c0_i32_0 : i32, i32
  }
  func.func @transform_3(%arg0: i32) -> (i32, i32) {
    %c0_i32 = arith.constant 0 : i32
    %c0_i32_0 = arith.constant 0 : i32
    %c0_i32_1 = arith.constant 0 : i32
    return %c0_i32, %c0_i32_0 : i32, i32
  }
  func.func @transform_4(%arg0: i32) -> (i32, i32) {
    %c0_i32 = arith.constant 0 : i32
    %c0_i32_0 = arith.constant 0 : i32
    %c0_i32_1 = arith.constant 0 : i32
    return %c0_i32, %c0_i32_0 : i32, i32
  }
  func.func @transform_5(%arg0: i32) -> (i32, i32) {
    %c0_i32 = arith.constant 0 : i32
    %c0_i32_0 = arith.constant 0 : i32
    return %arg0, %c0_i32 : i32, i32
  }
}

</mosaic_0001>

<llo_original>
// kernel: tpu_custom_call.1
$region0: #{tpu_custom_call.1}
  #allocation0 [shape = 'u32[]', space=smem, size = 0x4, offset = 0x4, fixed_abs, tag = 'smem constant byte address 0x4 - core index']
  #allocation1 [shape = 'u32[144,128]{1,0:T(1,128)}', space=vmem, size = 0x12000, scoped, tag = 'internal scratch']
  #allocation2 [shape = 'f32[8,128]{1,0:T(8,128)}', space=vmem, size = 0x1000, scoped, tag = 'scratch operand']
  %s0 = inlined_call_operand.hbm [shape: f32[8,32], index: 0, kind: input, shape index: {}]
  %s1 = inlined_call_operand.hbm [shape: f32[32,128], index: 1, kind: input, shape index: {}]
  %s2 = inlined_call_operand.vmem [shape: f32[1,128], index: 2, kind: input, shape index: {}]
  %s3 = inlined_call_operand.hbm [shape: f32[128,128], index: 3, kind: input, shape index: {}]
  %s4 = inlined_call_operand.vmem [shape: f32[1,128], index: 4, kind: input, shape index: {}]
  %s5 = inlined_call_operand.hbm [shape: f32[8,128], index: 5, kind: output, shape index: {}]
  %s6 = sld [smem:[#allocation0]]
  $region42: #{tpu_custom_call.1} parent=0
    _
  %s8 = ssub.s32 1, %s6
  %s9 = scalar_select 0, %s8, %s6
  $region1: #{tpu_custom_call.1} parent=0
    #allocation3 [shape = 'u8[4096]{0}', space=vmem, size = 0x1000, scoped, tag = 'input window, operand 0, single buffered']
    #allocation4 [shape = 's32[1]{0}', space=sflag, size = 0x4, scoped, tag = 'scoped memory for tpu_custom_call.1']
    #allocation5 [shape = 's32[1]{0}', space=sflag, size = 0x4, scoped, tag = 'scoped memory for tpu_custom_call.1']
    #allocation6 [shape = 'u8[16384]{0}', space=vmem, size = 0x4000, scoped, tag = 'input window, operand 1, single buffered']
    #allocation7 [shape = 's32[1]{0}', space=sflag, size = 0x4, scoped, tag = 'scoped memory for tpu_custom_call.1']
    #allocation8 [shape = 'u8[65536]{0}', space=vmem, size = 0x10000, scoped, tag = 'input window, operand 3, single buffered']
    #allocation9 [shape = 'u8[4096]{0}', space=vmem, size = 0x1000, scoped, tag = 'output window, operand 0, single buffered']
    %10 = vsyncpa [#allocation4], 0
    %11 = vsyncpa [#allocation7], 0
    %12 = vsyncpa [#allocation5], 0
    // Predicated region
    $region2: #{tpu_custom_call.1} parent=1 // pred_check
      _
    $region3: #{tpu_custom_call.1} parent=1 // pred_check_branch
      %14 = sbr.rel (0) target = $region5
    $region4: #{tpu_custom_call.1} parent=1 // pred_region
      %s16 = ssub.s32 128, 128
      %17 = vsyncadd [#allocation4], %s16
      %s19 = sshll.u32 [#allocation3], 4
      %s20 = int_to_ptr.vmem [resolvable:$true] %s19
      %22 = dma.hbm_to_vmem [thread:$0]  %s0, 128, %s20, [#allocation4]
    $region5: #{tpu_custom_call.1} parent=1 // pred_fallthru
      _
    // Predicated region
    $region6: #{tpu_custom_call.1} parent=1 // pred_check
      _
    $region7: #{tpu_custom_call.1} parent=1 // pred_check_branch
      %24 = sbr.rel (0) target = $region9
    $region8: #{tpu_custom_call.1} parent=1 // pred_region
      %s26 = ssub.s32 512, 512
      %27 = vsyncadd [#allocation7], %s26
      %s28 = sshll.u32 [#allocation6], 4
      %s29 = int_to_ptr.vmem [resolvable:$true] %s28
      %34 = dma.hbm_to_vmem [thread:$0]  %s1, 512, %s29, [#allocation7], 128, 128, 8
    $region9: #{tpu_custom_call.1} parent=1 // pred_fallthru
      _
    // Predicated region
    $region10: #{tpu_custom_call.1} parent=1 // pred_check
      _
    $region11: #{tpu_custom_call.1} parent=1 // pred_check_branch
      %36 = sbr.rel (0) target = $region13
    $region12: #{tpu_custom_call.1} parent=1 // pred_region
      _
    $region13: #{tpu_custom_call.1} parent=1 // pred_fallthru
      _
    // Predicated region
    $region14: #{tpu_custom_call.1} parent=1 // pred_check
      _
    $region15: #{tpu_custom_call.1} parent=1 // pred_check_branch
      %38 = sbr.rel (0) target = $region17
    $region16: #{tpu_custom_call.1} parent=1 // pred_region
      %s40 = ssub.s32 2048, 2048
      %41 = vsyncadd [#allocation7], %s40
      %s42 = sshll.u32 [#allocation8], 4
      %s43 = int_to_ptr.vmem [resolvable:$true] %s42
      %48 = dma.hbm_to_vmem [thread:$0]  %s3, 2048, %s43, [#allocation7], 128, 128, 8
    $region17: #{tpu_custom_call.1} parent=1 // pred_fallthru
      _
    // Predicated region
    $region18: #{tpu_custom_call.1} parent=1 // pred_check
      _
    $region19: #{tpu_custom_call.1} parent=1 // pred_check_branch
      %50 = sbr.rel (0) target = $region21
    $region20: #{tpu_custom_call.1} parent=1 // pred_region
      _
    $region21: #{tpu_custom_call.1} parent=1 // pred_fallthru
      _
    // Predicated region
    $region22: #{tpu_custom_call.1} parent=1 // pred_check
      _
    $region23: #{tpu_custom_call.1} parent=1 // pred_check_branch
      %52 = sbr.rel (0) target = $region25
    $region24: #{tpu_custom_call.1} parent=1 // pred_region
      %53 = dma.done [#allocation4], 128
    $region25: #{tpu_custom_call.1} parent=1 // pred_fallthru
      _
    // Predicated region
    $region26: #{tpu_custom_call.1} parent=1 // pred_check
      _
    $region27: #{tpu_custom_call.1} parent=1 // pred_check_branch
      %55 = sbr.rel (0) target = $region29
    $region28: #{tpu_custom_call.1} parent=1 // pred_region
      %56 = dma.done [#allocation7], 512
    $region29: #{tpu_custom_call.1} parent=1 // pred_fallthru
      _
    // Predicated region
    $region30: #{tpu_custom_call.1} parent=1 // pred_check
      _
    $region31: #{tpu_custom_call.1} parent=1 // pred_check_branch
      %58 = sbr.rel (0) target = $region33
    $region32: #{tpu_custom_call.1} parent=1 // pred_region
      %59 = dma.done [#allocation7], 2048
    $region33: #{tpu_custom_call.1} parent=1 // pred_fallthru
      _
    %v60 = vld [vmem:[#allocation3] sm:$0xff]
    %v61 = vld [vmem:[#allocation6] sm:$0xff]
    %v62 = vld [vmem:[#allocation6 + $0x8] sm:$0xff]
    %v63 = vld [vmem:[#allocation6 + $0x10] sm:$0xff]
    %v64 = vld [vmem:[#allocation6 + $0x18] sm:$0xff]
    %v65 = vld [vmem:[%s2] sm:$0x1]
    %v67 = vlaneseq
    %v68 = vshrl.u32 %v67, 7
    %v69 = vsub.s32 0, %v68
    %v70 = vrot.slane %v65, %v69
    %vm72 = vcmask 261120
    %v74 = vsel %vm72, %v60, 0
    %76 = vmatprep.subr.mxu0 0.0
    %77 = vmatpush1.msra.mxu0 0.0
    %78 = vmatprep.subr.mxu0 0.0
    %79 = vmatpush1.msra.mxu0 0.0
    %80 = vmatprep.subr.mxu0 0.0
    %81 = vmatpush1.msra.mxu0 0.0
    %82 = vmatprep.subr.mxu0 0.0
    %83 = vmatpush1.msra.mxu0 0.0
    %84 = vmatprep.subr.mxu0 0.0
    %85 = vmatpush1.msra.mxu0 0.0
    %86 = vmatprep.subr.mxu0 0.0
    %87 = vmatpush1.msra.mxu0 0.0
    %88 = vmatprep.subr.mxu0 0.0
    %89 = vmatpush1.msra.mxu0 0.0
    %90 = vmatprep.subr.mxu0 0.0
    %91 = vmatpush1.msra.mxu0 0.0
    %92 = vmatprep.subr.mxu0 0.0
    %93 = vmatpush1.msra.mxu0 0.0
    %94 = vmatprep.subr.mxu0 0.0
    %95 = vmatpush1.msra.mxu0 0.0
    %96 = vmatprep.subr.mxu0 0.0
    %97 = vmatpush1.msra.mxu0 0.0
    %98 = vmatprep.subr.mxu0 0.0
    %99 = vmatpush1.msra.mxu0 0.0
    %100 = vmatprep.subr.mxu0 0.0
    %101 = vmatpush1.msra.mxu0 %v64
    %102 = vmatprep.subr.mxu0 0.0
    %103 = vmatpush1.msra.mxu0 %v63
    %104 = vmatprep.subr.mxu0 0.0
    %105 = vmatpush1.msra.mxu0 %v62
    %106 = vmatprep.subr.mxu0 0.0
    %107 = vmatpush1.msra.mxu0 %v61
    %108 = vmatprep.subr.mxu0 0.0
    %109 = vmatpush2.msra.mxu0 0.0
    %110 = vmatprep.subr.mxu0 0.0
    %111 = vmatpush2.msra.mxu0 0.0
    %112 = vmatprep.subr.mxu0 0.0
    %113 = vmatpush2.msra.mxu0 0.0
    %114 = vmatprep.subr.mxu0 0.0
    %115 = vmatpush2.msra.mxu0 0.0
    %116 = vmatprep.subr.mxu0 0.0
    %117 = vmatpush2.msra.mxu0 0.0
    %118 = vmatprep.subr.mxu0 0.0
    %119 = vmatpush2.msra.mxu0 0.0
    %120 = vmatprep.subr.mxu0 0.0
    %121 = vmatpush2.msra.mxu0 0.0
    %122 = vmatprep.subr.mxu0 0.0
    %123 = vmatpush2.msra.mxu0 0.0
    %124 = vmatprep.subr.mxu0 0.0
    %125 = vmatpush2.msra.mxu0 0.0
    %126 = vmatprep.subr.mxu0 0.0
    %127 = vmatpush2.msra.mxu0 0.0
    %128 = vmatprep.subr.mxu0 0.0
    %129 = vmatpush2.msra.mxu0 0.0
    %130 = vmatprep.subr.mxu0 0.0
    %131 = vmatpush2.msra.mxu0 0.0
    %132 = vmatprep.subr.mxu0 0.0
    %133 = vmatpush2.msra.mxu0 0.0
    %134 = vmatprep.subr.mxu0 0.0
    %135 = vmatpush2.msra.mxu0 0.0
    %136 = vmatprep.subr.mxu0 0.0
    %137 = vmatpush2.msra.mxu0 0.0
    %138 = vmatprep.subr.mxu0 0.0
    %139 = vmatpush2.msra.mxu0 0.0
    %140 = vmatprep.mubr.f32.mxu0 0.0
    %141 = vmatmul.mubr.f32.gmra.mxu0 %v74
    %v142 = vpop.f32.mrf.mxu0
    %v143 = vadd.f32 %v70, %v142
    %v144 = vpop.f32.mrf.mxu0
    %145 = vdwg.mxu0
    %v146 = vmax.f32 %v143, 0.0
    %147 = vst [vmem:[#allocation2] sm:$0xff] %v146
    %v148 = vld [vmem:[#allocation2] sm:$0xff]
    %v149 = vld [vmem:[#allocation8] sm:$0xff]
    %v150 = vld [vmem:[#allocation8 + $0x8] sm:$0xff]
    %v151 = vld [vmem:[#allocation8 + $0x10] sm:$0xff]
    %v152 = vld [vmem:[#allocation8 + $0x18] sm:$0xff]
    %v153 = vld [vmem:[#allocation8 + $0x20] sm:$0xff]
    %v154 = vld [vmem:[#allocation8 + $0x28] sm:$0xff]
    %v155 = vld [vmem:[#allocation8 + $0x30] sm:$0xff]
    %v156 = vld [vmem:[#allocation8 + $0x38] sm:$0xff]
    %v157 = vld [vmem:[#allocation8 + $0x40] sm:$0xff]
    %v158 = vld [vmem:[#allocation8 + $0x48] sm:$0xff]
    %v159 = vld [vmem:[#allocation8 + $0x50] sm:$0xff]
    %v160 = vld [vmem:[#allocation8 + $0x58] sm:$0xff]
    %v161 = vld [vmem:[#allocation8 + $0x60] sm:$0xff]
    %v162 = vld [vmem:[#allocation8 + $0x68] sm:$0xff]
    %v163 = vld [vmem:[#allocation8 + $0x70] sm:$0xff]
    %v164 = vld [vmem:[#allocation8 + $0x78] sm:$0xff]
    %v165 = vld [vmem:[%s4] sm:$0x1]
    %v167 = vlaneseq
    %v168 = vshrl.u32 %v167, 7
    %v169 = vsub.s32 0, %v168
    %v170 = vrot.slane %v165, %v169
    %172 = vmatprep.subr.mxu0 0.0
    %173 = vmatpush1.msra.mxu0 %v164
    %174 = vmatprep.subr.mxu0 0.0
    %175 = vmatpush1.msra.mxu0 %v163
    %176 = vmatprep.subr.mxu0 0.0
    %177 = vmatpush1.msra.mxu0 %v162
    %178 = vmatprep.subr.mxu0 0.0
    %179 = vmatpush1.msra.mxu0 %v161
    %180 = vmatprep.subr.mxu0 0.0
    %181 = vmatpush1.msra.mxu0 %v160
    %182 = vmatprep.subr.mxu0 0.0
    %183 = vmatpush1.msra.mxu0 %v159
    %184 = vmatprep.subr.mxu0 0.0
    %185 = vmatpush1.msra.mxu0 %v158
    %186 = vmatprep.subr.mxu0 0.0
    %187 = vmatpush1.msra.mxu0 %v157
    %188 = vmatprep.subr.mxu0 0.0
    %189 = vmatpush1.msra.mxu0 %v156
    %190 = vmatprep.subr.mxu0 0.0
    %191 = vmatpush1.msra.mxu0 %v155
    %192 = vmatprep.subr.mxu0 0.0
    %193 = vmatpush1.msra.mxu0 %v154
    %194 = vmatprep.subr.mxu0 0.0
    %195 = vmatpush1.msra.mxu0 %v153
    %196 = vmatprep.subr.mxu0 0.0
    %197 = vmatpush1.msra.mxu0 %v152
    %198 = vmatprep.subr.mxu0 0.0
    %199 = vmatpush1.msra.mxu0 %v151
    %200 = vmatprep.subr.mxu0 0.0
    %201 = vmatpush1.msra.mxu0 %v150
    %202 = vmatprep.subr.mxu0 0.0
    %203 = vmatpush1.msra.mxu0 %v149
    %204 = vmatprep.subr.mxu0 0.0
    %205 = vmatpush2.msra.mxu0 0.0
    %206 = vmatprep.subr.mxu0 0.0
    %207 = vmatpush2.msra.mxu0 0.0
    %208 = vmatprep.subr.mxu0 0.0
    %209 = vmatpush2.msra.mxu0 0.0
    %210 = vmatprep.subr.mxu0 0.0
    %211 = vmatpush2.msra.mxu0 0.0
    %212 = vmatprep.subr.mxu0 0.0
    %213 = vmatpush2.msra.mxu0 0.0
    %214 = vmatprep.subr.mxu0 0.0
    %215 = vmatpush2.msra.mxu0 0.0
    %216 = vmatprep.subr.mxu0 0.0
    %217 = vmatpush2.msra.mxu0 0.0
    %218 = vmatprep.subr.mxu0 0.0
    %219 = vmatpush2.msra.mxu0 0.0
    %220 = vmatprep.subr.mxu0 0.0
    %221 = vmatpush2.msra.mxu0 0.0
    %222 = vmatprep.subr.mxu0 0.0
    %223 = vmatpush2.msra.mxu0 0.0
    %224 = vmatprep.subr.mxu0 0.0
    %225 = vmatpush2.msra.mxu0 0.0
    %226 = vmatprep.subr.mxu0 0.0
    %227 = vmatpush2.msra.mxu0 0.0
    %228 = vmatprep.subr.mxu0 0.0
    %229 = vmatpush2.msra.mxu0 0.0
    %230 = vmatprep.subr.mxu0 0.0
    %231 = vmatpush2.msra.mxu0 0.0
    %232 = vmatprep.subr.mxu0 0.0
    %233 = vmatpush2.msra.mxu0 0.0
    %234 = vmatprep.subr.mxu0 0.0
    %235 = vmatpush2.msra.mxu0 0.0
    %236 = vmatprep.mubr.f32.mxu0 0.0
    %237 = vmatmul.mubr.f32.gmra.mxu0 %v148
    %v238 = vpop.f32.mrf.mxu0
    %v239 = vadd.f32 %v170, %v238
    %v240 = vpop.f32.mrf.mxu0
    %241 = vdwg.mxu0
    %v242 = vxor.u32 %v239, 2147483648
    %v243 = vmul.f32 %v242, 1.442695
    %v244 = vpow.pop %v243
    %v245 = vadd.f32 %v244, 1.0
    %v246 = vrcp.pop %v245
    %v247 = vmul.f32 1.0, %v246
    %248 = vst [vmem:[#allocation9] sm:$0xff] %v247
    // Predicated region
    $region34: #{tpu_custom_call.1} parent=1 // pred_check
      _
    $region35: #{tpu_custom_call.1} parent=1 // pred_check_branch
      %250 = sbr.rel (0) target = $region37
    $region36: #{tpu_custom_call.1} parent=1 // pred_region
      %s252 = ssub.s32 128, 128
      %253 = vsyncadd [#allocation5], %s252
      %s255 = sshll.u32 [#allocation9], 4
      %s256 = int_to_ptr.vmem [resolvable:$true] %s255
      %258 = dma.vmem_to_hbm [thread:$0]  %s256, 128, %s5, [#allocation5]
    $region37: #{tpu_custom_call.1} parent=1 // pred_fallthru
      _
    // Predicated region
    $region38: #{tpu_custom_call.1} parent=1 // pred_check
      _
    $region39: #{tpu_custom_call.1} parent=1 // pred_check_branch
      %260 = sbr.rel (0) target = $region41
    $region40: #{tpu_custom_call.1} parent=1 // pred_region
      %261 = dma.done [#allocation5], 128
    $region41: #{tpu_custom_call.1} parent=1 // pred_fallthru
      _
    %262 = vsyncpa [#allocation4], 1
    %263 = vsyncpa [#allocation7], 1
    %264 = vsyncpa [#allocation5], 1

</llo_original>
